<compile_context>
chip_gen: v6e
topology: v6e:2x2x1
jax: 0.10.0
libtpu: 0.0.40
codegen_flags: <defaults>
</compile_context>

<pallas_src>
import jax
import jax.numpy as jnp
from jax.experimental import pallas as pl
from jax.experimental.pallas import tpu as pltpu


_PARALLEL = pltpu.CompilerParams(dimension_semantics=("parallel",))


def _pick_bx_tile(bx, by, h, itemsize, target_bytes=4 << 20):
    """Largest Bx tile that (a) divides bx, (b) is a multiple of 8 unless it
    equals bx (so the (tile, By) output block satisfies sublane tiling), and
    (c) keeps one x input block under ~target_bytes."""
    row_bytes = max(1, by * h * itemsize)
    max_tile = max(1, target_bytes // row_bytes)
    if bx <= max_tile:
        return bx
    for t in range(min(bx, max_tile), 0, -1):
        if bx % t == 0 and (t % 8 == 0 or t == bx):
            return t
    return bx


# ----------------------------- dot similarity ------------------------------ #
def _dot_kernel(x_ref, y_ref, o_ref):
    # f32 elementwise path (v5e VPU has no bf16 FMA); cast is per-tile, and a
    # no-op when inputs are already f32.
    x = x_ref[...].astype(jnp.float32)          # (TBx, By, H)
    y = y_ref[...].astype(jnp.float32)          # (1,   By, H) -> broadcasts
    o_ref[...] = jnp.sum(x * y, axis=-1).astype(o_ref.dtype)


def dot_similarity(x, y, *, block_bx=None):
    Bx, By, H = x.shape
    tbx = block_bx or _pick_bx_tile(Bx, By, H, x.dtype.itemsize)
    assert Bx % tbx == 0
    return pl.pallas_call(
        _dot_kernel,
        out_shape=jax.ShapeDtypeStruct((Bx, By), x.dtype),
        grid=(Bx // tbx,),
        in_specs=[
            pl.BlockSpec((tbx, By, H), lambda i: (i, 0, 0)),
            pl.BlockSpec((1, By, H), lambda i: (0, 0, 0)),   # resident in VMEM
        ],
        out_specs=pl.BlockSpec((tbx, By), lambda i: (i, 0)),
        compiler_params=_PARALLEL,
    )(x, y)


# -------------------------- perceptron similarity -------------------------- #
def _perceptron_kernel(x_ref, yproj_ref, w1x_ref, w2_ref, b2_ref, o_ref):
    TBx, By, Hx = x_ref.shape
    D = yproj_ref.shape[-1]

    # x-half of cat((x, y), -1) @ W1.T on the MXU; operands stay in their
    # native dtype (bf16 is the rated-peak path), accumulation in f32.
    xf = x_ref[...].reshape(TBx * By, Hx)
    h = jnp.dot(xf, w1x_ref[...], preferred_element_type=jnp.float32)   # (TBx*By, D)
    # y-half projection (+ b1) was hoisted out of the kernel: broadcast over Bx.
    h = h.reshape(TBx, By, D) + yproj_ref[...][None, :, :]
    h = jnp.tanh(h)                                                     # EUP, f32
    # 1-wide output head: VPU mul + lane reduction instead of an N=1 MXU matmul.
    w2 = w2_ref[...].astype(jnp.float32)[None, :, :]                    # (1, 1, D)
    sim = jnp.sum(h * w2, axis=-1) + b2_ref[0, 0]                       # (TBx, By)
    o_ref[...] = sim.astype(o_ref.dtype)


def perceptron_similarity(x, y, w1, b1, w2, b2, *, block_bx=None):
    # w1: (D, D) PyTorch Linear weight (out, in), D = Hx + Hy; b1: (D,)
    # w2: (1, D); b2: (1,)
    Bx, By, Hx = x.shape
    Hy = y.shape[-1]
    D = Hx + Hy

    # cat((x, y), -1) @ W1.T == x @ W1[:, :Hx].T + y @ W1[:, Hx:].T
    # Pre-split W1 host-side (avoids in-kernel sublane slicing / relayout) and
    # hoist the Bx-independent y projection (+ b1) out of the kernel entirely.
    w1x_t = jnp.transpose(w1[:, :Hx])                                   # (Hx, D)
    y_proj = (y[0].astype(jnp.float32)
              @ jnp.transpose(w1[:, Hx:]).astype(jnp.float32)
              + b1.astype(jnp.float32)[None, :])                        # (By, D)
    w2_row = w2.reshape(1, D)
    b2_s = b2.reshape(1, 1).astype(jnp.float32)

    tbx = block_bx or _pick_bx_tile(Bx, By, max(Hx, D), 4)
    assert Bx % tbx == 0
    return pl.pallas_call(
        _perceptron_kernel,
        out_shape=jax.ShapeDtypeStruct((Bx, By), x.dtype),
        grid=(Bx // tbx,),
        in_specs=[
            pl.BlockSpec((tbx, By, Hx), lambda i: (i, 0, 0)),
            pl.BlockSpec((By, D), lambda i: (0, 0)),          # resident
            pl.BlockSpec((Hx, D), lambda i: (0, 0)),          # resident
            pl.BlockSpec((1, D), lambda i: (0, 0)),           # resident
            pl.BlockSpec(memory_space=pltpu.MemorySpace.SMEM),
        ],
        out_specs=pl.BlockSpec((tbx, By), lambda i: (i, 0)),
        compiler_params=_PARALLEL,
    )(x, y_proj, w1x_t, w2_row, b2_s)


# --------------------------- general similarity ----------------------------- #
def general_similarity(x, y, w=None, b=None, *, block_bx=None):
    # The reference computes hidden = self.w(x) and never uses it; the dead
    # HxH linear is dropped (no HBM traffic / VMEM for an unused weight).
    del w, b
    return dot_similarity(x, y, block_bx=block_bx)


# ------------------------------ module wrapper ------------------------------ #
class Similarity:
    """JAX/Pallas port of lstm/model.py::Similarity."""

    def __init__(self, sim_type, x_h_dim=None, y_h_dim=None, key=None):
        self.sim_type = sim_type
        self.x_h_dim = x_h_dim
        self.y_h_dim = y_h_dim
        key = jax.random.PRNGKey(42) if key is None else key

        def linear_init(k, out_f, in_f):
            # nn.Linear default: U(-1/sqrt(in), 1/sqrt(in)) for weight and bias.
            k1, k2 = jax.random.split(k)
            bound = 1.0 / jnp.sqrt(jnp.float32(in_f))
            w = jax.random.uniform(k1, (out_f, in_f), jnp.float32, -bound, bound)
            b = jax.random.uniform(k2, (out_f,), jnp.float32, -bound, bound)
            return w, b

        if sim_type == 'perceptron':
            d = x_h_dim + y_h_dim
            k1, k2 = jax.random.split(key)
            self.w1, self.b1 = linear_init(k1, d, d)
            self.w2, self.b2 = linear_init(k2, 1, d)
        if sim_type == 'general':
            self.w, self.b = linear_init(key, x_h_dim, x_h_dim)

    def __call__(self, x, y):
        if self.sim_type == 'dot':
            return dot_similarity(x, y)
        if self.sim_type == 'perceptron':
            # TODO(synk): torch.cat does not broadcast, so the original code
            # requires y to already match x over Bx; we broadcast y over Bx,
            # which matches the reference when y is pre-expanded or Bx == 1.
            return perceptron_similarity(x, y, self.w1, self.b1, self.w2, self.b2)
        if self.sim_type == 'general':
            return general_similarity(x, y, self.w, self.b)
        return None


# --------------------------- pure-JAX references ---------------------------- #
def _ref_dot(x, y):
    return jnp.sum(x * y, axis=-1)


def _ref_perceptron(x, y, w1, b1, w2, b2):
    Bx, By, _ = x.shape
    y_b = jnp.broadcast_to(y, (Bx, By, y.shape[-1]))
    cat = jnp.concatenate([x, y_b], axis=-1)
    hidden = jnp.tanh(cat @ w1.T + b1)
    return (hidden @ w2.T + b2)[..., 0]


if __name__ == "__main__":
    key = jax.random.PRNGKey(0)
    kx, ky, kx2 = jax.random.split(key, 3)

    Bx, By, H = 8, 8, 32
    x = jax.random.normal(kx, (Bx, By, H), jnp.float32)
    y = jax.random.normal(ky, (1, By, H), jnp.float32)
    # "x and y should be normalized"
    x = x / jnp.linalg.norm(x, axis=-1, keepdims=True)
    y = y / jnp.linalg.norm(y, axis=-1, keepdims=True)

    # dot
    sim_dot = Similarity('dot')
    out_dot = jax.block_until_ready(sim_dot(x, y))
    assert out_dot.shape == (Bx, By)
    assert jnp.allclose(out_dot, _ref_dot(x, y), atol=1e-5, rtol=1e-5)

    # perceptron
    sim_p = Similarity('perceptron', x_h_dim=H, y_h_dim=H)
    out_p = jax.block_until_ready(sim_p(x, y))
    assert out_p.shape == (Bx, By)
    ref_p = _ref_perceptron(x, y, sim_p.w1, sim_p.b1, sim_p.w2, sim_p.b2)
    assert jnp.allclose(out_p, ref_p, atol=1e-4, rtol=1e-4)

    # general (returns dot similarity; internal linear is dead compute -> dropped)
    sim_g = Similarity('general', x_h_dim=H)
    out_g = jax.block_until_ready(sim_g(x, y))
    assert out_g.shape == (Bx, By)
    assert jnp.allclose(out_g, _ref_dot(x, y), atol=1e-5, rtol=1e-5)

    # exercise the real (grid > 1) tiled path over Bx
    Bx2 = 32
    x2 = jax.random.normal(kx2, (Bx2, By, H), jnp.float32)
    x2 = x2 / jnp.linalg.norm(x2, axis=-1, keepdims=True)

    out_dot2 = jax.block_until_ready(dot_similarity(x2, y, block_bx=8))
    assert out_dot2.shape == (Bx2, By)
    assert jnp.allclose(out_dot2, _ref_dot(x2, y), atol=1e-5, rtol=1e-5)

    out_p2 = jax.block_until_ready(
        perceptron_similarity(x2, y, sim_p.w1, sim_p.b1, sim_p.w2, sim_p.b2,
                              block_bx=8))
    assert out_p2.shape == (Bx2, By)
    ref_p2 = _ref_perceptron(x2, y, sim_p.w1, sim_p.b1, sim_p.w2, sim_p.b2)
    assert jnp.allclose(out_p2, ref_p2, atol=1e-4, rtol=1e-4)

    print("KERNEL_OK")
</pallas_src>

<mosaic_0001>
module attributes {stable_mosaic.version = 11 : i64} {
  func.func @_dot_kernel(%arg0: i32, %arg1: memref<8x8x32xf32, #tpu.memory_space<vmem>>, %arg2: memref<1x8x32xf32, #tpu.memory_space<vmem>>, %arg3: memref<8x8xf32, #tpu.memory_space<vmem>>) attributes {dimension_semantics = [#tpu.dimension_semantics<parallel>], iteration_bounds = array<i64: 1>, scalar_prefetch = 0 : i64, scratch_operands = 0 : i64, tpu.core_type = #tpu.core_type<tc>, window_params = [{transform_indices = @transform_0, window_bounds = array<i64: 8, 8, 32>}, {pipeline_mode = #tpu.pipeline_mode<synchronous>, transform_indices = @transform_1, window_bounds = array<i64: 1, 8, 32>}, {transform_indices = @transform_2, window_bounds = array<i64: 8, 8>}]} {
    %c0 = arith.constant 0 : index
    %c0_0 = arith.constant 0 : index
    %c0_1 = arith.constant 0 : index
    %0 = vector.load %arg1[%c0, %c0_0, %c0_1] : memref<8x8x32xf32, #tpu.memory_space<vmem>>, vector<8x8x32xf32>
    %c0_2 = arith.constant 0 : index
    %c0_3 = arith.constant 0 : index
    %c0_4 = arith.constant 0 : index
    %1 = vector.load %arg2[%c0_2, %c0_3, %c0_4] : memref<1x8x32xf32, #tpu.memory_space<vmem>>, vector<1x8x32xf32>
    %2 = vector.broadcast %1 : vector<1x8x32xf32> to vector<8x8x32xf32>
    %3 = arith.mulf %0, %2 : vector<8x8x32xf32>
    %cst = arith.constant dense<0.000000e+00> : vector<8x8xf32>
    %4 = vector.multi_reduction <add>, %3, %cst [2] : vector<8x8x32xf32> to vector<8x8xf32>
    %c0_5 = arith.constant 0 : index
    %c0_6 = arith.constant 0 : index
    %5 = vector.load %arg3[%c0_5, %c0_6] : memref<8x8xf32, #tpu.memory_space<vmem>>, vector<8x8xf32>
    tpu.vector_store %arg3[%c0_5, %c0_6], %4 {strides = array<i32>} : memref<8x8xf32, #tpu.memory_space<vmem>>, vector<8x8xf32>,
    return
  }
  func.func @transform_0(%arg0: i32) -> (i32, i32, i32) {
    %c0_i32 = arith.constant 0 : i32
    %c0_i32_0 = arith.constant 0 : i32
    %c0_i32_1 = arith.constant 0 : i32
    return %arg0, %c0_i32, %c0_i32_0 : i32, i32, i32
  }
  func.func @transform_1(%arg0: i32) -> (i32, i32, i32) {
    %c0_i32 = arith.constant 0 : i32
    %c0_i32_0 = arith.constant 0 : i32
    %c0_i32_1 = arith.constant 0 : i32
    %c0_i32_2 = arith.constant 0 : i32
    return %c0_i32, %c0_i32_0, %c0_i32_1 : i32, i32, i32
  }
  func.func @transform_2(%arg0: i32) -> (i32, i32) {
    %c0_i32 = arith.constant 0 : i32
    %c0_i32_0 = arith.constant 0 : i32
    return %arg0, %c0_i32 : i32, i32
  }
}

</mosaic_0001>

<llo_original>
// kernel: tpu_custom_call.1
$region0: #{tpu_custom_call.1}
  #allocation0 [shape = 'u32[]', space=smem, size = 0x4, offset = 0x4, fixed_abs, tag = 'smem constant byte address 0x4 - core index']
  #allocation1 [shape = 'u32[144,128]{1,0:T(1,128)}', space=vmem, size = 0x12000, scoped, tag = 'internal scratch']
  %s0 = inlined_call_operand.hbm [shape: f32[8,8,32], index: 0, kind: input, shape index: {}]
  %s1 = inlined_call_operand.hbm [shape: f32[1,8,32], index: 1, kind: input, shape index: {}]
  %s2 = inlined_call_operand.hbm [shape: f32[8,8], index: 2, kind: output, shape index: {}]
  %s3 = sld [smem:[#allocation0]]
  $region26: #{tpu_custom_call.1} parent=0
    _
  %s5 = ssub.s32 1, %s3
  %s6 = scalar_select 0, %s5, %s3
  $region1: #{tpu_custom_call.1} parent=0
    #allocation2 [shape = 'u8[32768]{0}', space=vmem, size = 0x8000, scoped, tag = 'input window, operand 0, single buffered']
    #allocation3 [shape = 's32[1]{0}', space=sflag, size = 0x4, scoped, tag = 'scoped memory for tpu_custom_call.1']
    #allocation4 [shape = 's32[1]{0}', space=sflag, size = 0x4, scoped, tag = 'scoped memory for tpu_custom_call.1']
    #allocation5 [shape = 'u8[4096]{0}', space=vmem, size = 0x1000, scoped, tag = 'input window, operand 1, single buffered']
    #allocation6 [shape = 's32[1]{0}', space=sflag, size = 0x4, scoped, tag = 'scoped memory for tpu_custom_call.1']
    #allocation7 [shape = 'u8[4096]{0}', space=vmem, size = 0x1000, scoped, tag = 'output window, operand 0, single buffered']
    %7 = vsyncpa [#allocation3], 0
    %8 = vsyncpa [#allocation6], 0
    %9 = vsyncpa [#allocation4], 0
    // Predicated region
    $region2: #{tpu_custom_call.1} parent=1 // pred_check
      _
    $region3: #{tpu_custom_call.1} parent=1 // pred_check_branch
      %11 = sbr.rel (0) target = $region5
    $region4: #{tpu_custom_call.1} parent=1 // pred_region
      %s13 = ssub.s32 1024, 1024
      %14 = vsyncadd [#allocation3], %s13
      %s15 = sshll.u32 [#allocation2], 4
      %s16 = int_to_ptr.vmem [resolvable:$true] %s15
      %21 = dma.hbm_to_vmem [thread:$0]  %s0, 1024, %s16, [#allocation3], 128, 128, 8
    $region5: #{tpu_custom_call.1} parent=1 // pred_fallthru
      _
    // Predicated region
    $region6: #{tpu_custom_call.1} parent=1 // pred_check
      _
    $region7: #{tpu_custom_call.1} parent=1 // pred_check_branch
      %23 = sbr.rel (0) target = $region9
    $region8: #{tpu_custom_call.1} parent=1 // pred_region
      %s25 = ssub.s32 128, 128
      %26 = vsyncadd [#allocation6], %s25
      %s28 = sshll.u32 [#allocation5], 4
      %s29 = int_to_ptr.vmem [resolvable:$true] %s28
      %31 = dma.hbm_to_vmem [thread:$0]  %s1, 128, %s29, [#allocation6]
    $region9: #{tpu_custom_call.1} parent=1 // pred_fallthru
      _
    // Predicated region
    $region10: #{tpu_custom_call.1} parent=1 // pred_check
      _
    $region11: #{tpu_custom_call.1} parent=1 // pred_check_branch
      %33 = sbr.rel (0) target = $region13
    $region12: #{tpu_custom_call.1} parent=1 // pred_region
      %34 = dma.done [#allocation3], 1024
    $region13: #{tpu_custom_call.1} parent=1 // pred_fallthru
      _
    // Predicated region
    $region14: #{tpu_custom_call.1} parent=1 // pred_check
      _
    $region15: #{tpu_custom_call.1} parent=1 // pred_check_branch
      %36 = sbr.rel (0) target = $region17
    $region16: #{tpu_custom_call.1} parent=1 // pred_region
      %37 = dma.done [#allocation6], 128
    $region17: #{tpu_custom_call.1} parent=1 // pred_fallthru
      _
    %v38 = vld [vmem:[#allocation2] sm:$0xff]
    %v39 = vld [vmem:[#allocation2 + $0x8] sm:$0xff]
    %v40 = vld [vmem:[#allocation2 + $0x10] sm:$0xff]
    %v41 = vld [vmem:[#allocation2 + $0x18] sm:$0xff]
    %v42 = vld [vmem:[#allocation2 + $0x20] sm:$0xff]
    %v43 = vld [vmem:[#allocation2 + $0x28] sm:$0xff]
    %v44 = vld [vmem:[#allocation2 + $0x30] sm:$0xff]
    %v45 = vld [vmem:[#allocation2 + $0x38] sm:$0xff]
    %v46 = vld [vmem:[#allocation5] sm:$0xff]
    %v47 = vmul.f32 %v38, %v46
    %v48 = vmul.f32 %v39, %v46
    %v49 = vmul.f32 %v40, %v46
    %v50 = vmul.f32 %v41, %v46
    %v51 = vmul.f32 %v42, %v46
    %v52 = vmul.f32 %v43, %v46
    %v53 = vmul.f32 %v44, %v46
    %v54 = vmul.f32 %v45, %v46
    %vm55 = vcmask 261120
    %v56 = vsel %vm55, %v47, 0.0
    %57 = vadd.xlane.f32.xlu0 %v56
    %v58 = vpop.xlane.xlu0 %57
    %v59 = vsel %vm55, %v48, 0.0
    %60 = vadd.xlane.f32.xlu0 %v59
    %v61 = vpop.xlane.xlu0 %60
    %v62 = vsel %vm55, %v49, 0.0
    %63 = vadd.xlane.f32.xlu0 %v62
    %v64 = vpop.xlane.xlu0 %63
    %v65 = vsel %vm55, %v50, 0.0
    %66 = vadd.xlane.f32.xlu0 %v65
    %v67 = vpop.xlane.xlu0 %66
    %v68 = vsel %vm55, %v51, 0.0
    %69 = vadd.xlane.f32.xlu0 %v68
    %v70 = vpop.xlane.xlu0 %69
    %v71 = vsel %vm55, %v52, 0.0
    %72 = vadd.xlane.f32.xlu0 %v71
    %v73 = vpop.xlane.xlu0 %72
    %v74 = vsel %vm55, %v53, 0.0
    %75 = vadd.xlane.f32.xlu0 %v74
    %v76 = vpop.xlane.xlu0 %75
    %v77 = vsel %vm55, %v54, 0.0
    %78 = vadd.xlane.f32.xlu0 %v77
    %v79 = vpop.xlane.xlu0 %78
    %v88 = vlaneseq
    %v89 = vand.u32 %v88, 127
    %v90 = vlaneseq
    %v91 = vshrl.u32 %v90, 7
    %v92 = vsub.s32 %v89, %v91
    %v93 = vrot.slane %v58, %v92
    %v94 = vlaneseq
    %v95 = vshrl.u32 %v94, 7
    %v96 = vsub.s32 %v89, %v95
    %v97 = vrot.slane %v61, %v96
    %v98 = vlaneseq
    %v99 = vshrl.u32 %v98, 7
    %v100 = vsub.s32 %v89, %v99
    %v101 = vrot.slane %v64, %v100
    %v102 = vlaneseq
    %v103 = vshrl.u32 %v102, 7
    %v104 = vsub.s32 %v89, %v103
    %v105 = vrot.slane %v67, %v104
    %v106 = vlaneseq
    %v107 = vshrl.u32 %v106, 7
    %v108 = vsub.s32 %v89, %v107
    %v109 = vrot.slane %v70, %v108
    %v110 = vlaneseq
    %v111 = vshrl.u32 %v110, 7
    %v112 = vsub.s32 %v89, %v111
    %v113 = vrot.slane %v73, %v112
    %v114 = vlaneseq
    %v115 = vshrl.u32 %v114, 7
    %v116 = vsub.s32 %v89, %v115
    %v117 = vrot.slane %v76, %v116
    %v118 = vlaneseq
    %v119 = vshrl.u32 %v118, 7
    %v120 = vsub.s32 %v89, %v119
    %v121 = vrot.slane %v79, %v120
    %vm122 = vcmask 1041409
    %v123 = vsel %vm122, %v97, %v93
    %vm124 = vcmask 1042434
    %v125 = vsel %vm124, %v101, %v123
    %vm126 = vcmask 1043459
    %v127 = vsel %vm126, %v105, %v125
    %vm128 = vcmask 1044484
    %v129 = vsel %vm128, %v109, %v127
    %vm130 = vcmask 1045509
    %v131 = vsel %vm130, %v113, %v129
    %vm132 = vcmask 1046534
    %v133 = vsel %vm132, %v117, %v131
    %vm134 = vcmask 1047559
    %v135 = vsel %vm134, %v121, %v133
    %vm137 = vcmask 64512
    %138 = vst.msk [vmem:[#allocation7] sm:$0xff] %vm137, %v135
    // Predicated region
    $region18: #{tpu_custom_call.1} parent=1 // pred_check
      _
    $region19: #{tpu_custom_call.1} parent=1 // pred_check_branch
      %140 = sbr.rel (0) target = $region21
    $region20: #{tpu_custom_call.1} parent=1 // pred_region
      %s142 = ssub.s32 128, 128
      %143 = vsyncadd [#allocation4], %s142
      %s145 = sshll.u32 [#allocation7], 4
      %s146 = int_to_ptr.vmem [resolvable:$true] %s145
      %148 = dma.vmem_to_hbm [thread:$0]  %s146, 128, %s2, [#allocation4]
    $region21: #{tpu_custom_call.1} parent=1 // pred_fallthru
      _
    // Predicated region
    $region22: #{tpu_custom_call.1} parent=1 // pred_check
      _
    $region23: #{tpu_custom_call.1} parent=1 // pred_check_branch
      %150 = sbr.rel (0) target = $region25
    $region24: #{tpu_custom_call.1} parent=1 // pred_region
      %151 = dma.done [#allocation4], 128
    $region25: #{tpu_custom_call.1} parent=1 // pred_fallthru
      _
    %152 = vsyncpa [#allocation3], 1
    %153 = vsyncpa [#allocation6], 1
    %154 = vsyncpa [#allocation4], 1

</llo_original>
